<compile_context>
chip_gen: v5e
topology: v5e:2x2
jax: 0.10.0
libtpu: 0.0.40
codegen_flags: <defaults>
</compile_context>

<pallas_src>
import math

import jax
import jax.numpy as jnp
from jax import lax
from jax.experimental import pallas as pl
from jax.experimental.pallas import tpu as pltpu

TIME_PROJ_DIM = 256            # Timesteps(num_channels=256)
HALF_DIM = TIME_PROJ_DIM // 2  # 128
MAX_PERIOD = 10000.0


def _build_kernel(TN, D):
    """Kernel closure over the static tiling parameters."""

    def kernel(labels_ref,            # SMEM (N_pad,) int32   (scalar prefetch)
               t_ref,                 # VMEM (TN, 1)   f32    timesteps column
               freqs_ref,             # VMEM (1, 128)  f32    precomputed frequencies
               w1c_ref, w1s_ref,      # VMEM (128, D)  bf16   Linear_1 weight halves
               b1_ref,                # VMEM (1, D)    f32
               w2_ref,                # VMEM (D, D)    bf16
               b2_ref,                # VMEM (1, D)    f32
               table_ref,             # VMEM (C1, D)   f32    full class table (resident)
               out_ref):              # VMEM (TN, D)   f32
        i = pl.program_id(0)          # batch tile

        # ---- 1. sinusoidal projection (flip_sin_to_cos=True -> [cos | sin])
        ang = t_ref[...] * freqs_ref[...]          # (TN, 128) f32
        cos_h = jnp.cos(ang).astype(jnp.bfloat16)
        sin_h = jnp.sin(ang).astype(jnp.bfloat16)

        # ---- 2. Linear(256 -> D) split over the cos/sin halves (no lane concat),
        #         bf16 operands, f32 accumulate, then SiLU (f32).
        h = (jnp.dot(cos_h, w1c_ref[...], preferred_element_type=jnp.float32)
             + jnp.dot(sin_h, w1s_ref[...], preferred_element_type=jnp.float32)
             + b1_ref[...])
        h = h * jax.nn.sigmoid(h)

        # ---- 3. Linear(D -> D), f32 accumulate
        t_emb = (jnp.dot(h.astype(jnp.bfloat16), w2_ref[...],
                         preferred_element_type=jnp.float32)
                 + b2_ref[...])
        out_ref[...] = t_emb.astype(out_ref.dtype)

        # ---- 4. add class-embedding rows: per-row dynamic slice from the resident
        #         VMEM table, label index read from SMEM (scalar prefetch).
        base = i * TN

        def add_row(r, carry):
            lbl = labels_ref[base + r]
            out_ref[pl.ds(r, 1), :] = (out_ref[pl.ds(r, 1), :]
                                       + table_ref[pl.ds(lbl, 1), :])
            return carry

        lax.fori_loop(0, TN, add_row, 0, unroll=(TN <= 16))

    return kernel


def prepare_params(params):
    """One-time parameter preparation: bf16 weight casts, bias reshapes, freq row."""
    table = jnp.asarray(params["embedding_table"], jnp.float32)   # (num_classes+1, D)
    w1 = jnp.asarray(params["w1"], jnp.float32)                   # (256, D) == torch weight.T
    b1 = jnp.asarray(params["b1"], jnp.float32)                   # (D,)
    w2 = jnp.asarray(params["w2"], jnp.float32)                   # (D, D)
    b2 = jnp.asarray(params["b2"], jnp.float32)                   # (D,)
    D = w1.shape[1]

    # input-independent frequency row exp(-log(10000) * k / 128)
    k = jnp.arange(HALF_DIM, dtype=jnp.float32)
    freqs = jnp.exp(-(math.log(MAX_PERIOD) / HALF_DIM) * k).reshape(1, HALF_DIM)

    return {
        "w1c": w1[:HALF_DIM, :].astype(jnp.bfloat16),   # multiplies the cos half
        "w1s": w1[HALF_DIM:, :].astype(jnp.bfloat16),   # multiplies the sin half
        "b1": b1.reshape(1, D),
        "w2": w2.astype(jnp.bfloat16),
        "b2": b2.reshape(1, D),
        "table": table,
        "freqs": freqs,
    }


def combined_timestep_label_embeddings(timestep, class_labels, prepared):
    """timestep: (N,) f32 ; class_labels: (N,) int ; returns (N, D) f32."""
    D = prepared["w1c"].shape[1]
    table = prepared["table"]
    C1 = table.shape[0]
    N = int(timestep.shape[0])
    assert D % 128 == 0, "embedding_dim must be a multiple of 128"

    # batch tile: big enough to fill MXU rows, multiple of 8, capped at 128
    TN = min(128, ((N + 7) // 8) * 8)
    N_pad = ((N + TN - 1) // TN) * TN

    # pad batch (padded rows: t=0, label clamped -> sliced off at the end)
    t_in = jnp.zeros((N_pad, 1), jnp.float32).at[:N, 0].set(timestep.astype(jnp.float32))
    lbl_in = jnp.zeros((N_pad,), jnp.int32).at[:N].set(
        jnp.clip(class_labels.astype(jnp.int32), 0, C1 - 1))

    # rough resident-VMEM estimate (x2 for pipeline buffering); raise scoped limit
    # above the default if a big D / big table needs it.
    vmem_est = 2 * (2 * HALF_DIM * D * 2 + D * D * 2 + 2 * D * 4
                    + C1 * D * 4 + TN * D * 4 + TN * 8 + HALF_DIM * 4)
    compiler_params = pltpu.CompilerParams(
        dimension_semantics=("parallel",),
        vmem_limit_bytes=int(max(vmem_est + (4 << 20), 32 << 20)),
    )

    kernel = _build_kernel(TN, D)

    out = pl.pallas_call(
        kernel,
        out_shape=jax.ShapeDtypeStruct((N_pad, D), jnp.float32),
        grid_spec=pltpu.PrefetchScalarGridSpec(
            num_scalar_prefetch=1,                                  # labels -> SMEM
            grid=(N_pad // TN,),
            in_specs=[
                pl.BlockSpec((TN, 1), lambda i, lbl: (i, 0)),       # timesteps
                pl.BlockSpec((1, HALF_DIM), lambda i, lbl: (0, 0)), # freqs (const)
                pl.BlockSpec((HALF_DIM, D), lambda i, lbl: (0, 0)), # w1 cos half
                pl.BlockSpec((HALF_DIM, D), lambda i, lbl: (0, 0)), # w1 sin half
                pl.BlockSpec((1, D), lambda i, lbl: (0, 0)),        # b1
                pl.BlockSpec((D, D), lambda i, lbl: (0, 0)),        # w2 (no column tiling)
                pl.BlockSpec((1, D), lambda i, lbl: (0, 0)),        # b2
                pl.BlockSpec((C1, D), lambda i, lbl: (0, 0)),       # full class table
            ],
            out_specs=pl.BlockSpec((TN, D), lambda i, lbl: (i, 0)),
        ),
        compiler_params=compiler_params,
    )(lbl_in, t_in, prepared["freqs"], prepared["w1c"], prepared["w1s"],
      prepared["b1"], prepared["w2"], prepared["b2"], table)

    return out[:N]


def _reference(timestep, class_labels, params):
    """Plain-JAX f32 reference of the PyTorch forward (eval mode)."""
    half = HALF_DIM
    exponent = -math.log(MAX_PERIOD) * jnp.arange(half, dtype=jnp.float32) / half
    emb = jnp.exp(exponent)
    emb = timestep.astype(jnp.float32)[:, None] * emb[None, :]
    emb = jnp.concatenate([jnp.sin(emb), jnp.cos(emb)], axis=-1)
    emb = jnp.concatenate([emb[:, half:], emb[:, :half]], axis=-1)   # flip_sin_to_cos
    h = emb @ params["w1"] + params["b1"]
    h = h * jax.nn.sigmoid(h)
    t_emb = h @ params["w2"] + params["b2"]
    cls_emb = params["embedding_table"][class_labels]
    return t_emb + cls_emb


if __name__ == "__main__":
    # small, deterministic config
    num_classes = 10
    embedding_dim = 128
    batch = 8

    key = jax.random.PRNGKey(0)
    k_tab, k_w1, k_b1, k_w2, k_b2, k_t, k_l = jax.random.split(key, 7)

    params = {
        # nn.Embedding(num_classes + 1, D)  (+1 cfg slot since dropout_prob > 0)
        "embedding_table": 0.02 * jax.random.normal(
            k_tab, (num_classes + 1, embedding_dim), jnp.float32),
        # nn.Linear(256, D): weight stored transposed as (in, out)
        "w1": 0.02 * jax.random.normal(k_w1, (TIME_PROJ_DIM, embedding_dim), jnp.float32),
        "b1": 0.02 * jax.random.normal(k_b1, (embedding_dim,), jnp.float32),
        # nn.Linear(D, D)
        "w2": 0.02 * jax.random.normal(k_w2, (embedding_dim, embedding_dim), jnp.float32),
        "b2": 0.02 * jax.random.normal(k_b2, (embedding_dim,), jnp.float32),
    }

    timestep = jax.random.uniform(k_t, (batch,), jnp.float32, 0.0, 1000.0)
    class_labels = jax.random.randint(k_l, (batch,), 0, num_classes, jnp.int32)

    prepared = prepare_params(params)   # one-time bf16 casts / reshapes (not per call)

    out = combined_timestep_label_embeddings(timestep, class_labels, prepared)
    out = jax.block_until_ready(out)

    ref = _reference(timestep, class_labels, params)
    assert out.shape == (batch, embedding_dim)
    # bf16 weights on the MXU (f32 accumulation) -> slightly looser tolerance than pure f32
    assert jnp.allclose(out, ref, atol=5e-3, rtol=5e-3), "mismatch vs reference"

    print("KERNEL_OK")
</pallas_src>

<mosaic_0001>
module attributes {stable_mosaic.version = 11 : i64} {
  func.func @kernel(%arg0: i32, %arg1: memref<8xi32, #tpu.memory_space<smem>>, %arg2: memref<8x1xf32, #tpu.memory_space<vmem>>, %arg3: memref<1x128xf32, #tpu.memory_space<vmem>>, %arg4: memref<128x128xbf16, #tpu.memory_space<vmem>>, %arg5: memref<128x128xbf16, #tpu.memory_space<vmem>>, %arg6: memref<1x128xf32, #tpu.memory_space<vmem>>, %arg7: memref<128x128xbf16, #tpu.memory_space<vmem>>, %arg8: memref<1x128xf32, #tpu.memory_space<vmem>>, %arg9: memref<11x128xf32, #tpu.memory_space<vmem>>, %arg10: memref<8x128xf32, #tpu.memory_space<vmem>>) attributes {dimension_semantics = [#tpu.dimension_semantics<parallel>], iteration_bounds = array<i64: 1>, scalar_prefetch = 1 : i64, scratch_operands = 0 : i64, tpu.core_type = #tpu.core_type<tc>, window_params = [{transform_indices = @transform_0, window_bounds = array<i64: 8, 1>}, {pipeline_mode = #tpu.pipeline_mode<synchronous>, transform_indices = @transform_1, window_bounds = array<i64: 1, 128>}, {pipeline_mode = #tpu.pipeline_mode<synchronous>, transform_indices = @transform_2, window_bounds = array<i64: 128, 128>}, {pipeline_mode = #tpu.pipeline_mode<synchronous>, transform_indices = @transform_3, window_bounds = array<i64: 128, 128>}, {pipeline_mode = #tpu.pipeline_mode<synchronous>, transform_indices = @transform_4, window_bounds = array<i64: 1, 128>}, {pipeline_mode = #tpu.pipeline_mode<synchronous>, transform_indices = @transform_5, window_bounds = array<i64: 128, 128>}, {pipeline_mode = #tpu.pipeline_mode<synchronous>, transform_indices = @transform_6, window_bounds = array<i64: 1, 128>}, {pipeline_mode = #tpu.pipeline_mode<synchronous>, transform_indices = @transform_7, window_bounds = array<i64: 11, 128>}, {transform_indices = @transform_8, window_bounds = array<i64: 8, 128>}]} {
    %c0 = arith.constant 0 : index
    %c0_0 = arith.constant 0 : index
    %0 = vector.load %arg2[%c0, %c0_0] : memref<8x1xf32, #tpu.memory_space<vmem>>, vector<8x1xf32>
    %c0_1 = arith.constant 0 : index
    %c0_2 = arith.constant 0 : index
    %1 = vector.load %arg3[%c0_1, %c0_2] : memref<1x128xf32, #tpu.memory_space<vmem>>, vector<1x128xf32>
    %2 = vector.broadcast %0 : vector<8x1xf32> to vector<8x128xf32>
    %3 = vector.broadcast %1 : vector<1x128xf32> to vector<8x128xf32>
    %4 = arith.mulf %2, %3 : vector<8x128xf32>
    %5 = math.cos %4 : vector<8x128xf32>
    %6 = arith.truncf %5 : vector<8x128xf32> to vector<8x128xbf16>
    %7 = math.sin %4 : vector<8x128xf32>
    %8 = arith.truncf %7 : vector<8x128xf32> to vector<8x128xbf16>
    %c0_3 = arith.constant 0 : index
    %c0_4 = arith.constant 0 : index
    %9 = vector.load %arg4[%c0_3, %c0_4] : memref<128x128xbf16, #tpu.memory_space<vmem>>, vector<128x128xbf16>
    %cst = arith.constant dense<0.000000e+00> : vector<8x128xf32>
    %10 = tpu.matmul %6, %9, %cst {dimension_numbers = #tpu.dot_dimension_numbers<[1], [0], [0], [1], [0, 0, 1, 1], [], []>} : vector<8x128xbf16>, vector<128x128xbf16>, vector<8x128xf32> -> vector<8x128xf32>
    %c0_5 = arith.constant 0 : index
    %c0_6 = arith.constant 0 : index
    %11 = vector.load %arg5[%c0_5, %c0_6] : memref<128x128xbf16, #tpu.memory_space<vmem>>, vector<128x128xbf16>
    %cst_7 = arith.constant dense<0.000000e+00> : vector<8x128xf32>
    %12 = tpu.matmul %8, %11, %cst_7 {dimension_numbers = #tpu.dot_dimension_numbers<[1], [0], [0], [1], [0, 0, 1, 1], [], []>} : vector<8x128xbf16>, vector<128x128xbf16>, vector<8x128xf32> -> vector<8x128xf32>
    %13 = arith.addf %10, %12 : vector<8x128xf32>
    %c0_8 = arith.constant 0 : index
    %c0_9 = arith.constant 0 : index
    %14 = vector.load %arg6[%c0_8, %c0_9] : memref<1x128xf32, #tpu.memory_space<vmem>>, vector<1x128xf32>
    %15 = vector.broadcast %14 : vector<1x128xf32> to vector<8x128xf32>
    %16 = arith.addf %13, %15 : vector<8x128xf32>
    %17 = arith.negf %16 : vector<8x128xf32>
    %18 = math.exp %17 : vector<8x128xf32>
    %cst_10 = arith.constant 1.000000e+00 : f32
    %19 = vector.broadcast %cst_10 : f32 to vector<8x128xf32>
    %20 = arith.addf %19, %18 : vector<8x128xf32>
    %21 = arith.divf %19, %20 : vector<8x128xf32>
    %22 = arith.mulf %16, %21 : vector<8x128xf32>
    %23 = arith.truncf %22 : vector<8x128xf32> to vector<8x128xbf16>
    %c0_11 = arith.constant 0 : index
    %c0_12 = arith.constant 0 : index
    %24 = vector.load %arg7[%c0_11, %c0_12] : memref<128x128xbf16, #tpu.memory_space<vmem>>, vector<128x128xbf16>
    %cst_13 = arith.constant dense<0.000000e+00> : vector<8x128xf32>
    %25 = tpu.matmul %23, %24, %cst_13 {dimension_numbers = #tpu.dot_dimension_numbers<[1], [0], [0], [1], [0, 0, 1, 1], [], []>} : vector<8x128xbf16>, vector<128x128xbf16>, vector<8x128xf32> -> vector<8x128xf32>
    %c0_14 = arith.constant 0 : index
    %c0_15 = arith.constant 0 : index
    %26 = vector.load %arg8[%c0_14, %c0_15] : memref<1x128xf32, #tpu.memory_space<vmem>>, vector<1x128xf32>
    %27 = vector.broadcast %26 : vector<1x128xf32> to vector<8x128xf32>
    %28 = arith.addf %25, %27 : vector<8x128xf32>
    %c0_16 = arith.constant 0 : index
    %c0_17 = arith.constant 0 : index
    %29 = vector.load %arg10[%c0_16, %c0_17] : memref<8x128xf32, #tpu.memory_space<vmem>>, vector<8x128xf32>
    tpu.vector_store %arg10[%c0_16, %c0_17], %28 {strides = array<i32>} : memref<8x128xf32, #tpu.memory_space<vmem>>, vector<8x128xf32>,
    %c8_i32 = arith.constant 8 : i32
    %30 = arith.muli %arg0, %c8_i32 : i32
    %c0_i32 = arith.constant 0 : i32
    %31 = arith.addi %30, %c0_i32 : i32
    %32 = arith.index_cast %31 : i32 to index
    %33 = memref.load %arg1[%32] : memref<8xi32, #tpu.memory_space<smem>>
    %34 = arith.index_cast %c0_i32 : i32 to index
    %c0_18 = arith.constant 0 : index
    %35 = vector.load %arg10[%34, %c0_18] : memref<8x128xf32, #tpu.memory_space<vmem>>, vector<1x128xf32>
    %36 = arith.index_cast %33 : i32 to index
    %c0_19 = arith.constant 0 : index
    %37 = vector.load %arg9[%36, %c0_19] : memref<11x128xf32, #tpu.memory_space<vmem>>, vector<1x128xf32>
    %38 = arith.addf %35, %37 : vector<1x128xf32>
    %39 = arith.index_cast %c0_i32 : i32 to index
    %c0_20 = arith.constant 0 : index
    %40 = vector.load %arg10[%39, %c0_20] : memref<8x128xf32, #tpu.memory_space<vmem>>, vector<1x128xf32>
    tpu.vector_store %arg10[%39, %c0_20], %38 {strides = array<i32>} : memref<8x128xf32, #tpu.memory_space<vmem>>, vector<1x128xf32>,
    %c1_i32 = arith.constant 1 : i32
    %41 = arith.addi %30, %c1_i32 : i32
    %42 = arith.index_cast %41 : i32 to index
    %43 = memref.load %arg1[%42] : memref<8xi32, #tpu.memory_space<smem>>
    %44 = arith.index_cast %c1_i32 : i32 to index
    %c0_21 = arith.constant 0 : index
    %45 = vector.load %arg10[%44, %c0_21] : memref<8x128xf32, #tpu.memory_space<vmem>>, vector<1x128xf32>
    %46 = arith.index_cast %43 : i32 to index
    %c0_22 = arith.constant 0 : index
    %47 = vector.load %arg9[%46, %c0_22] : memref<11x128xf32, #tpu.memory_space<vmem>>, vector<1x128xf32>
    %48 = arith.addf %45, %47 : vector<1x128xf32>
    %49 = arith.index_cast %c1_i32 : i32 to index
    %c0_23 = arith.constant 0 : index
    %50 = vector.load %arg10[%49, %c0_23] : memref<8x128xf32, #tpu.memory_space<vmem>>, vector<1x128xf32>
    tpu.vector_store %arg10[%49, %c0_23], %48 {strides = array<i32>} : memref<8x128xf32, #tpu.memory_space<vmem>>, vector<1x128xf32>,
    %c2_i32 = arith.constant 2 : i32
    %51 = arith.addi %30, %c2_i32 : i32
    %52 = arith.index_cast %51 : i32 to index
    %53 = memref.load %arg1[%52] : memref<8xi32, #tpu.memory_space<smem>>
    %54 = arith.index_cast %c2_i32 : i32 to index
    %c0_24 = arith.constant 0 : index
    %55 = vector.load %arg10[%54, %c0_24] : memref<8x128xf32, #tpu.memory_space<vmem>>, vector<1x128xf32>
    %56 = arith.index_cast %53 : i32 to index
    %c0_25 = arith.constant 0 : index
    %57 = vector.load %arg9[%56, %c0_25] : memref<11x128xf32, #tpu.memory_space<vmem>>, vector<1x128xf32>
    %58 = arith.addf %55, %57 : vector<1x128xf32>
    %59 = arith.index_cast %c2_i32 : i32 to index
    %c0_26 = arith.constant 0 : index
    %60 = vector.load %arg10[%59, %c0_26] : memref<8x128xf32, #tpu.memory_space<vmem>>, vector<1x128xf32>
    tpu.vector_store %arg10[%59, %c0_26], %58 {strides = array<i32>} : memref<8x128xf32, #tpu.memory_space<vmem>>, vector<1x128xf32>,
    %c3_i32 = arith.constant 3 : i32
    %61 = arith.addi %30, %c3_i32 : i32
    %62 = arith.index_cast %61 : i32 to index
    %63 = memref.load %arg1[%62] : memref<8xi32, #tpu.memory_space<smem>>
    %64 = arith.index_cast %c3_i32 : i32 to index
    %c0_27 = arith.constant 0 : index
    %65 = vector.load %arg10[%64, %c0_27] : memref<8x128xf32, #tpu.memory_space<vmem>>, vector<1x128xf32>
    %66 = arith.index_cast %63 : i32 to index
    %c0_28 = arith.constant 0 : index
    %67 = vector.load %arg9[%66, %c0_28] : memref<11x128xf32, #tpu.memory_space<vmem>>, vector<1x128xf32>
    %68 = arith.addf %65, %67 : vector<1x128xf32>
    %69 = arith.index_cast %c3_i32 : i32 to index
    %c0_29 = arith.constant 0 : index
    %70 = vector.load %arg10[%69, %c0_29] : memref<8x128xf32, #tpu.memory_space<vmem>>, vector<1x128xf32>
    tpu.vector_store %arg10[%69, %c0_29], %68 {strides = array<i32>} : memref<8x128xf32, #tpu.memory_space<vmem>>, vector<1x128xf32>,
    %c4_i32 = arith.constant 4 : i32
    %71 = arith.addi %30, %c4_i32 : i32
    %72 = arith.index_cast %71 : i32 to index
    %73 = memref.load %arg1[%72] : memref<8xi32, #tpu.memory_space<smem>>
    %74 = arith.index_cast %c4_i32 : i32 to index
    %c0_30 = arith.constant 0 : index
    %75 = vector.load %arg10[%74, %c0_30] : memref<8x128xf32, #tpu.memory_space<vmem>>, vector<1x128xf32>
    %76 = arith.index_cast %73 : i32 to index
    %c0_31 = arith.constant 0 : index
    %77 = vector.load %arg9[%76, %c0_31] : memref<11x128xf32, #tpu.memory_space<vmem>>, vector<1x128xf32>
    %78 = arith.addf %75, %77 : vector<1x128xf32>
    %79 = arith.index_cast %c4_i32 : i32 to index
    %c0_32 = arith.constant 0 : index
    %80 = vector.load %arg10[%79, %c0_32] : memref<8x128xf32, #tpu.memory_space<vmem>>, vector<1x128xf32>
    tpu.vector_store %arg10[%79, %c0_32], %78 {strides = array<i32>} : memref<8x128xf32, #tpu.memory_space<vmem>>, vector<1x128xf32>,
    %c5_i32 = arith.constant 5 : i32
    %81 = arith.addi %30, %c5_i32 : i32
    %82 = arith.index_cast %81 : i32 to index
    %83 = memref.load %arg1[%82] : memref<8xi32, #tpu.memory_space<smem>>
    %84 = arith.index_cast %c5_i32 : i32 to index
    %c0_33 = arith.constant 0 : index
    %85 = vector.load %arg10[%84, %c0_33] : memref<8x128xf32, #tpu.memory_space<vmem>>, vector<1x128xf32>
    %86 = arith.index_cast %83 : i32 to index
    %c0_34 = arith.constant 0 : index
    %87 = vector.load %arg9[%86, %c0_34] : memref<11x128xf32, #tpu.memory_space<vmem>>, vector<1x128xf32>
    %88 = arith.addf %85, %87 : vector<1x128xf32>
    %89 = arith.index_cast %c5_i32 : i32 to index
    %c0_35 = arith.constant 0 : index
    %90 = vector.load %arg10[%89, %c0_35] : memref<8x128xf32, #tpu.memory_space<vmem>>, vector<1x128xf32>
    tpu.vector_store %arg10[%89, %c0_35], %88 {strides = array<i32>} : memref<8x128xf32, #tpu.memory_space<vmem>>, vector<1x128xf32>,
    %c6_i32 = arith.constant 6 : i32
    %91 = arith.addi %30, %c6_i32 : i32
    %92 = arith.index_cast %91 : i32 to index
    %93 = memref.load %arg1[%92] : memref<8xi32, #tpu.memory_space<smem>>
    %94 = arith.index_cast %c6_i32 : i32 to index
    %c0_36 = arith.constant 0 : index
    %95 = vector.load %arg10[%94, %c0_36] : memref<8x128xf32, #tpu.memory_space<vmem>>, vector<1x128xf32>
    %96 = arith.index_cast %93 : i32 to index
    %c0_37 = arith.constant 0 : index
    %97 = vector.load %arg9[%96, %c0_37] : memref<11x128xf32, #tpu.memory_space<vmem>>, vector<1x128xf32>
    %98 = arith.addf %95, %97 : vector<1x128xf32>
    %99 = arith.index_cast %c6_i32 : i32 to index
    %c0_38 = arith.constant 0 : index
    %100 = vector.load %arg10[%99, %c0_38] : memref<8x128xf32, #tpu.memory_space<vmem>>, vector<1x128xf32>
    tpu.vector_store %arg10[%99, %c0_38], %98 {strides = array<i32>} : memref<8x128xf32, #tpu.memory_space<vmem>>, vector<1x128xf32>,
    %c7_i32 = arith.constant 7 : i32
    %101 = arith.addi %30, %c7_i32 : i32
    %102 = arith.index_cast %101 : i32 to index
    %103 = memref.load %arg1[%102] : memref<8xi32, #tpu.memory_space<smem>>
    %104 = arith.index_cast %c7_i32 : i32 to index
    %c0_39 = arith.constant 0 : index
    %105 = vector.load %arg10[%104, %c0_39] : memref<8x128xf32, #tpu.memory_space<vmem>>, vector<1x128xf32>
    %106 = arith.index_cast %103 : i32 to index
    %c0_40 = arith.constant 0 : index
    %107 = vector.load %arg9[%106, %c0_40] : memref<11x128xf32, #tpu.memory_space<vmem>>, vector<1x128xf32>
    %108 = arith.addf %105, %107 : vector<1x128xf32>
    %109 = arith.index_cast %c7_i32 : i32 to index
    %c0_41 = arith.constant 0 : index
    %110 = vector.load %arg10[%109, %c0_41] : memref<8x128xf32, #tpu.memory_space<vmem>>, vector<1x128xf32>
    tpu.vector_store %arg10[%109, %c0_41], %108 {strides = array<i32>} : memref<8x128xf32, #tpu.memory_space<vmem>>, vector<1x128xf32>,
    %c8_i32_42 = arith.constant 8 : i32
    return
  }
  func.func @transform_0(%arg0: i32, %arg1: memref<8xi32, #tpu.memory_space<smem>>) -> (i32, i32) {
    %c0_i32 = arith.constant 0 : i32
    %c0_i32_0 = arith.constant 0 : i32
    return %arg0, %c0_i32 : i32, i32
  }
  func.func @transform_1(%arg0: i32, %arg1: memref<8xi32, #tpu.memory_space<smem>>) -> (i32, i32) {
    %c0_i32 = arith.constant 0 : i32
    %c0_i32_0 = arith.constant 0 : i32
    %c0_i32_1 = arith.constant 0 : i32
    return %c0_i32, %c0_i32_0 : i32, i32
  }
  func.func @transform_2(%arg0: i32, %arg1: memref<8xi32, #tpu.memory_space<smem>>) -> (i32, i32) {
    %c0_i32 = arith.constant 0 : i32
    %c0_i32_0 = arith.constant 0 : i32
    %c0_i32_1 = arith.constant 0 : i32
    return %c0_i32, %c0_i32_0 : i32, i32
  }
  func.func @transform_3(%arg0: i32, %arg1: memref<8xi32, #tpu.memory_space<smem>>) -> (i32, i32) {
    %c0_i32 = arith.constant 0 : i32
    %c0_i32_0 = arith.constant 0 : i32
    %c0_i32_1 = arith.constant 0 : i32
    return %c0_i32, %c0_i32_0 : i32, i32
  }
  func.func @transform_4(%arg0: i32, %arg1: memref<8xi32, #tpu.memory_space<smem>>) -> (i32, i32) {
    %c0_i32 = arith.constant 0 : i32
    %c0_i32_0 = arith.constant 0 : i32
    %c0_i32_1 = arith.constant 0 : i32
    return %c0_i32, %c0_i32_0 : i32, i32
  }
  func.func @transform_5(%arg0: i32, %arg1: memref<8xi32, #tpu.memory_space<smem>>) -> (i32, i32) {
    %c0_i32 = arith.constant 0 : i32
    %c0_i32_0 = arith.constant 0 : i32
    %c0_i32_1 = arith.constant 0 : i32
    return %c0_i32, %c0_i32_0 : i32, i32
  }
  func.func @transform_6(%arg0: i32, %arg1: memref<8xi32, #tpu.memory_space<smem>>) -> (i32, i32) {
    %c0_i32 = arith.constant 0 : i32
    %c0_i32_0 = arith.constant 0 : i32
    %c0_i32_1 = arith.constant 0 : i32
    return %c0_i32, %c0_i32_0 : i32, i32
  }
  func.func @transform_7(%arg0: i32, %arg1: memref<8xi32, #tpu.memory_space<smem>>) -> (i32, i32) {
    %c0_i32 = arith.constant 0 : i32
    %c0_i32_0 = arith.constant 0 : i32
    %c0_i32_1 = arith.constant 0 : i32
    return %c0_i32, %c0_i32_0 : i32, i32
  }
  func.func @transform_8(%arg0: i32, %arg1: memref<8xi32, #tpu.memory_space<smem>>) -> (i32, i32) {
    %c0_i32 = arith.constant 0 : i32
    %c0_i32_0 = arith.constant 0 : i32
    return %arg0, %c0_i32 : i32, i32
  }
}

</mosaic_0001>

<llo_original>
// kernel: tpu_custom_call.1
$region0: #{tpu_custom_call.1}
  #allocation0 [shape = 'u32[]', space=smem, size = 0x4, offset = 0x4, fixed_abs, tag = 'smem constant byte address 0x4 - core index']
  #allocation1 [shape = 'u32[72,128]{1,0:T(1,128)}', space=vmem, size = 0x9000, scoped, tag = 'internal scratch']
  #allocation2 [shape = 's32[1]{0}', space=sflag, size = 0x4, scoped, tag = 'scoped memory for tpu_custom_call.1']
  #allocation3 [shape = 'u8[512]{0}', space=smem, size = 0x200, scoped, tag = 'prefetched SMEM operand 0']
  %s0 = inlined_call_operand.hbm [shape: s32[8], index: 0, kind: input, shape index: {}]
  %s1 = inlined_call_operand.vmem [shape: f32[8,1], index: 1, kind: input, shape index: {}]
  %s2 = inlined_call_operand.hbm [shape: f32[1,128], index: 2, kind: input, shape index: {}]
  %s3 = inlined_call_operand.hbm [shape: bf16[128,128], index: 3, kind: input, shape index: {}]
  %s4 = inlined_call_operand.hbm [shape: bf16[128,128], index: 4, kind: input, shape index: {}]
  %s5 = inlined_call_operand.hbm [shape: f32[1,128], index: 5, kind: input, shape index: {}]
  %s6 = inlined_call_operand.hbm [shape: bf16[128,128], index: 6, kind: input, shape index: {}]
  %s7 = inlined_call_operand.hbm [shape: f32[1,128], index: 7, kind: input, shape index: {}]
  %s8 = inlined_call_operand.vmem [shape: f32[11,128], index: 8, kind: input, shape index: {}]
  %s9 = inlined_call_operand.hbm [shape: f32[8,128], index: 9, kind: output, shape index: {}]
  %s10 = sld [smem:[#allocation0]]
  $region66: #{tpu_custom_call.1} parent=0
    _
  %s12 = ssub.s32 1, %s10
  %s13 = scalar_select 0, %s12, %s10
  %s15 = sshll.u32 %s0, 4
  %s16 = int_to_ptr.hbm [resolvable:$true] %s15
  %18 = dma.hbm_to_smem %s16, 16, [#allocation3], [#allocation2]
  %20 = dma.done [#allocation2], 16
  %21 = sfence
  $region1: #{tpu_custom_call.1} parent=0
    #allocation4 [shape = 'u8[512]{0}', space=vmem, size = 0x400, scoped, tag = 'input window, operand 2, single buffered']
    #allocation5 [shape = 's32[1]{0}', space=sflag, size = 0x4, scoped, tag = 'scoped memory for tpu_custom_call.1']
    #allocation6 [shape = 's32[1]{0}', space=sflag, size = 0x4, scoped, tag = 'scoped memory for tpu_custom_call.1']
    #allocation7 [shape = 'u8[32768]{0}', space=vmem, size = 0x8000, scoped, tag = 'input window, operand 3, single buffered']
    #allocation8 [shape = 's32[1]{0}', space=sflag, size = 0x4, scoped, tag = 'scoped memory for tpu_custom_call.1']
    #allocation9 [shape = 'u8[32768]{0}', space=vmem, size = 0x8000, scoped, tag = 'input window, operand 4, single buffered']
    #allocation10 [shape = 'u8[512]{0}', space=vmem, size = 0x400, scoped, tag = 'input window, operand 5, single buffered']
    #allocation11 [shape = 's32[1]{0}', space=sflag, size = 0x4, scoped, tag = 'scoped memory for tpu_custom_call.1']
    #allocation12 [shape = 'u8[32768]{0}', space=vmem, size = 0x8000, scoped, tag = 'input window, operand 6, single buffered']
    #allocation13 [shape = 'u8[512]{0}', space=vmem, size = 0x400, scoped, tag = 'input window, operand 7, single buffered']
    #allocation14 [shape = 's32[1]{0}', space=sflag, size = 0x4, scoped, tag = 'scoped memory for tpu_custom_call.1']
    #allocation15 [shape = 'u8[4096]{0}', space=vmem, size = 0x1000, scoped, tag = 'output window, operand 0, single buffered']
    %22 = vsyncpa [#allocation5], 0
    %23 = vsyncpa [#allocation8], 0
    %24 = vsyncpa [#allocation11], 0
    %25 = vsyncpa [#allocation14], 0
    %26 = vsyncpa [#allocation6], 0
    // Predicated region
    $region2: #{tpu_custom_call.1} parent=1 // pred_check
      _
    $region3: #{tpu_custom_call.1} parent=1 // pred_check_branch
      %28 = sbr.rel (0) target = $region5
    $region4: #{tpu_custom_call.1} parent=1 // pred_region
      _
    $region5: #{tpu_custom_call.1} parent=1 // pred_fallthru
      _
    // Predicated region
    $region6: #{tpu_custom_call.1} parent=1 // pred_check
      _
    $region7: #{tpu_custom_call.1} parent=1 // pred_check_branch
      %30 = sbr.rel (0) target = $region9
    $region8: #{tpu_custom_call.1} parent=1 // pred_region
      %32 = vsyncadd [#allocation5], 0
      %s34 = sshll.u32 %s2, 4
      %s35 = int_to_ptr.hbm [resolvable:$true] %s34
      %s36 = sshll.u32 [#allocation4], 4
      %s37 = int_to_ptr.vmem [resolvable:$true] %s36
      %39 = dma.hbm_to_vmem [thread:$0]  %s35, 16, %s37, [#allocation5]
    $region9: #{tpu_custom_call.1} parent=1 // pred_fallthru
      _
    // Predicated region
    $region10: #{tpu_custom_call.1} parent=1 // pred_check
      _
    $region11: #{tpu_custom_call.1} parent=1 // pred_check_branch
      %41 = sbr.rel (0) target = $region13
    $region12: #{tpu_custom_call.1} parent=1 // pred_region
      %43 = vsyncadd [#allocation8], 0
      %s44 = sshll.u32 %s3, 4
      %s45 = int_to_ptr.hbm [resolvable:$true] %s44
      %s46 = sshll.u32 [#allocation7], 4
      %s47 = int_to_ptr.vmem [resolvable:$true] %s46
      %52 = dma.hbm_to_vmem [thread:$0]  %s45, 1024, %s47, [#allocation8], 64, 64, 4
    $region13: #{tpu_custom_call.1} parent=1 // pred_fallthru
      _
    // Predicated region
    $region14: #{tpu_custom_call.1} parent=1 // pred_check
      _
    $region15: #{tpu_custom_call.1} parent=1 // pred_check_branch
      %54 = sbr.rel (0) target = $region17
    $region16: #{tpu_custom_call.1} parent=1 // pred_region
      %56 = vsyncadd [#allocation8], 0
      %s57 = sshll.u32 %s4, 4
      %s58 = int_to_ptr.hbm [resolvable:$true] %s57
      %s59 = sshll.u32 [#allocation9], 4
      %s60 = int_to_ptr.vmem [resolvable:$true] %s59
      %65 = dma.hbm_to_vmem [thread:$0]  %s58, 1024, %s60, [#allocation8], 64, 64, 4
    $region17: #{tpu_custom_call.1} parent=1 // pred_fallthru
      _
    // Predicated region
    $region18: #{tpu_custom_call.1} parent=1 // pred_check
      _
    $region19: #{tpu_custom_call.1} parent=1 // pred_check_branch
      %67 = sbr.rel (0) target = $region21
    $region20: #{tpu_custom_call.1} parent=1 // pred_region
      %69 = vsyncadd [#allocation11], 0
      %s71 = sshll.u32 %s5, 4
      %s72 = int_to_ptr.hbm [resolvable:$true] %s71
      %s73 = sshll.u32 [#allocation10], 4
      %s74 = int_to_ptr.vmem [resolvable:$true] %s73
      %76 = dma.hbm_to_vmem [thread:$0]  %s72, 16, %s74, [#allocation11]
    $region21: #{tpu_custom_call.1} parent=1 // pred_fallthru
      _
    // Predicated region
    $region22: #{tpu_custom_call.1} parent=1 // pred_check
      _
    $region23: #{tpu_custom_call.1} parent=1 // pred_check_branch
      %78 = sbr.rel (0) target = $region25
    $region24: #{tpu_custom_call.1} parent=1 // pred_region
      %80 = vsyncadd [#allocation11], 0
      %s81 = sshll.u32 %s6, 4
      %s82 = int_to_ptr.hbm [resolvable:$true] %s81
      %s83 = sshll.u32 [#allocation12], 4
      %s84 = int_to_ptr.vmem [resolvable:$true] %s83
      %89 = dma.hbm_to_vmem [thread:$0]  %s82, 1024, %s84, [#allocation11], 64, 64, 4
    $region25: #{tpu_custom_call.1} parent=1 // pred_fallthru
      _
    // Predicated region
    $region26: #{tpu_custom_call.1} parent=1 // pred_check
      _
    $region27: #{tpu_custom_call.1} parent=1 // pred_check_branch
      %91 = sbr.rel (0) target = $region29
    $region28: #{tpu_custom_call.1} parent=1 // pred_region
      %93 = vsyncadd [#allocation14], 0
      %s95 = sshll.u32 %s7, 4
      %s96 = int_to_ptr.hbm [resolvable:$true] %s95
      %s97 = sshll.u32 [#allocation13], 4
      %s98 = int_to_ptr.vmem [resolvable:$true] %s97
      %100 = dma.hbm_to_vmem [thread:$0]  %s96, 16, %s98, [#allocation14]
    $region29: #{tpu_custom_call.1} parent=1 // pred_fallthru
      _
    // Predicated region
    $region30: #{tpu_custom_call.1} parent=1 // pred_check
      _
    $region31: #{tpu_custom_call.1} parent=1 // pred_check_branch
      %102 = sbr.rel (0) target = $region33
    $region32: #{tpu_custom_call.1} parent=1 // pred_region
      _
    $region33: #{tpu_custom_call.1} parent=1 // pred_fallthru
      _
    // Predicated region
    $region34: #{tpu_custom_call.1} parent=1 // pred_check
      _
    $region35: #{tpu_custom_call.1} parent=1 // pred_check_branch
      %104 = sbr.rel (0) target = $region37
    $region36: #{tpu_custom_call.1} parent=1 // pred_region
      %106 = dma.done [#allocation5], 16
    $region37: #{tpu_custom_call.1} parent=1 // pred_fallthru
      _
    // Predicated region
    $region38: #{tpu_custom_call.1} parent=1 // pred_check
      _
    $region39: #{tpu_custom_call.1} parent=1 // pred_check_branch
      %108 = sbr.rel (0) target = $region41
    $region40: #{tpu_custom_call.1} parent=1 // pred_region
      %110 = dma.done [#allocation8], 1024
    $region41: #{tpu_custom_call.1} parent=1 // pred_fallthru
      _
    // Predicated region
    $region42: #{tpu_custom_call.1} parent=1 // pred_check
      _
    $region43: #{tpu_custom_call.1} parent=1 // pred_check_branch
      %112 = sbr.rel (0) target = $region45
    $region44: #{tpu_custom_call.1} parent=1 // pred_region
      %114 = dma.done [#allocation8], 1024
    $region45: #{tpu_custom_call.1} parent=1 // pred_fallthru
      _
    // Predicated region
    $region46: #{tpu_custom_call.1} parent=1 // pred_check
      _
    $region47: #{tpu_custom_call.1} parent=1 // pred_check_branch
      %116 = sbr.rel (0) target = $region49
    $region48: #{tpu_custom_call.1} parent=1 // pred_region
      %118 = dma.done [#allocation11], 16
    $region49: #{tpu_custom_call.1} parent=1 // pred_fallthru
      _
    // Predicated region
    $region50: #{tpu_custom_call.1} parent=1 // pred_check
      _
    $region51: #{tpu_custom_call.1} parent=1 // pred_check_branch
      %120 = sbr.rel (0) target = $region53
    $region52: #{tpu_custom_call.1} parent=1 // pred_region
      %122 = dma.done [#allocation11], 1024
    $region53: #{tpu_custom_call.1} parent=1 // pred_fallthru
      _
    // Predicated region
    $region54: #{tpu_custom_call.1} parent=1 // pred_check
      _
    $region55: #{tpu_custom_call.1} parent=1 // pred_check_branch
      %124 = sbr.rel (0) target = $region57
    $region56: #{tpu_custom_call.1} parent=1 // pred_region
      %126 = dma.done [#allocation14], 16
    $region57: #{tpu_custom_call.1} parent=1 // pred_fallthru
      _
    %v127 = vld [vmem:[%s1] sm:$0xff]
    %v128 = vld [vmem:[#allocation4] sm:$0x1]
    %130 = vset.pattern.permute.xlu0 0
    %131 = vperm.xlu0 %130, %v127
    %v132 = vpop.permute.xlu0 %131
    %v135 = vperm.slane %v128, 0
    %v137 = vmul.f32 %v132, %v135
    %v138 = vand.u32 2147483647, %v137
    %vm139 = vcmp.le.f32.partialorder %v138, 0.7853982
    %vm140 = vcmp.lt.s32.totalorder %v137, 0
    %v141 = vand.u32 %v137, 2139095040
    %v142 = vshrl.u32 %v141, 23
    %v143 = vsub.s32 %v142, 127
    %v144 = vand.u32 2147483647, %v137
    %v145 = vand.u32 %v144, 8388607
    %v146 = vor.u32 %v145, 8388608
    %v147 = vsub.s32 0, %v146
    %v148 = vadd.s32 %v143, 1
    %vm149 = vcmp.gt.s32.totalorder %v148, 0
    %v150 = vsel %vm149, %v148, 0
    %v151 = vshrl.u32 %v150, 5
    %v152 = vand.u32 %v150, 31
    %v153 = vsub.s32 32, %v152
    %v154 = vshrl.u32 683565275, %v153
    %v155 = vshll.u32 683565275, %v152
    %v156 = vshrl.u32 2475754826, %v153
    %v157 = vor.u32 %v155, %v156
    %v158 = vshll.u32 2475754826, %v152
    %v159 = vshrl.u32 2131351028, %v153
    %v160 = vor.u32 %v158, %v159
    %v161 = vshll.u32 2131351028, %v152
    %v162 = vshrl.u32 2102212464, %v153
    %v163 = vor.u32 %v161, %v162
    %v164 = vshll.u32 2102212464, %v152
    %v165 = vshrl.u32 920167782, %v153
    %v166 = vor.u32 %v164, %v165
    %v167 = vshll.u32 920167782, %v152
    %v168 = vshrl.u32 1326507024, %v153
    %v169 = vor.u32 %v167, %v168
    %vm170 = vcmp.lt.s32.totalorder %v151, 1
    %vm171 = vcmp.lt.s32.totalorder %v151, 2
    %vm172 = vcmp.lt.s32.totalorder %v151, 3
    %vm173 = vcmp.lt.s32.totalorder %v151, 4
    %v174 = vsel %vm170, %v154, %v157
    %v175 = vsel %vm173, %v163, 2102212464
    %v176 = vsel %vm172, %v160, %v175
    %v177 = vsel %vm171, %v174, %v176
    %v178 = vsel %vm170, %v157, %v160
    %v179 = vsel %vm173, %v166, 920167782
    %v180 = vsel %vm172, %v163, %v179
    %v181 = vsel %vm171, %v178, %v180
    %v182 = vsel %vm170, %v160, %v163
    %v183 = vsel %vm173, %v169, 1326507024
    %v184 = vsel %vm172, %v166, %v183
    %v185 = vsel %vm171, %v182, %v184
    %v186 = vshll.u32 %v146, 8
    %v187 = vand.u32 %v186, 65535
    %v188 = vshrl.u32 %v186, 16
    %v189 = vand.u32 %v185, 65535
    %v190 = vshrl.u32 %v185, 16
    %v191 = vmul.u32 %v187, %v189
    %v192 = vmul.u32 %v187, %v190
    %v193 = vmul.u32 %v188, %v189
    %v194 = vmul.u32 %v188, %v190
    %v195 = vshll.u32 %v192, 16
    %v196 = vshrl.u32 %v192, 16
    %v197 = vshll.u32 %v193, 16
    %v198 = vshrl.u32 %v193, 16
    %vm199 = vc.u32 %v191, %v195
    %v200 = vsel %vm199, 1, 0
    %v201 = vadd.s32 %v191, %v195
    %v202 = vadd.s32 %v194, %v200
    %vm203 = vc.u32 %v201, %v197
    %v204 = vsel %vm203, 1, 0
    %v205 = vadd.s32 %v201, %v197
    %v206 = vadd.s32 %v202, %v204
    %v207 = vadd.s32 %v206, %v196
    %v208 = vadd.s32 %v207, %v198
    %v209 = vand.u32 %v186, 65535
    %v210 = vshrl.u32 %v186, 16
    %v211 = vand.u32 %v181, 65535
    %v212 = vshrl.u32 %v181, 16
    %v213 = vmul.u32 %v209, %v211
    %v214 = vmul.u32 %v209, %v212
    %v215 = vmul.u32 %v210, %v211
    %v216 = vmul.u32 %v210, %v212
    %v217 = vshll.u32 %v214, 16
    %v218 = vshrl.u32 %v214, 16
    %v219 = vshll.u32 %v215, 16
    %v220 = vshrl.u32 %v215, 16
    %vm221 = vc.u32 %v213, %v217
    %v222 = vsel %vm221, 1, 0
    %v223 = vadd.s32 %v213, %v217
    %v224 = vadd.s32 %v216, %v222
    %vm225 = vc.u32 %v223, %v219
    %v226 = vsel %vm225, 1, 0
    %v227 = vadd.s32 %v223, %v219
    %v228 = vadd.s32 %v224, %v226
    %v229 = vadd.s32 %v228, %v218
    %v230 = vadd.s32 %v229, %v220
    %v231 = vmul.u32 %v186, %v177
    %v232 = vadd.s32 %v208, %v227
    %vm233 = vc.u32 %v208, %v227
    %v234 = vadd.s32 %v230, 1
    %v235 = vsel %vm233, %v234, %v230
    %v236 = vadd.s32 %v231, %v235
    %v237 = vadd.s32 %v236, 536870912
    %v238 = vshrl.u32 %v237, 30
    %v239 = vshll.u32 %v238, 30
    %v240 = vsub.s32 %v236, %v239
    %vm241 = vcmp.lt.s32.totalorder %v240, 0
    %v242 = vsub.s32 0, %v240
    %v243 = vsel %vm241, %v242, %v240
    %v244 = vclz %v243
    %v245 = vsub.s32 %v244, 2
    %vm246 = vcmp.gt.s32.totalorder 0, %v245
    %v247 = vsel %vm246, 0, %v245
    %v248 = vsub.s32 32, %v247
    %v249 = vshll.u32 %v240, %v247
    %v250 = vshrl.u32 %v232, %v248
    %v251 = vor.u32 %v249, %v250
    %v252 = vsub.s32 4294967266, %v247
    %v253 = vadd.s32 %v252, 127
    %v254 = vshll.u32 %v253, 23
    %v255 = vor.u32 4788187, %v254
    %v256 = vand.u32 2147483647, %v255
    %v258 = vcvt.s32.f32 %v251
    %v259 = vmul.f32 %v258, %v256
    %v260 = vxor.u32 %v259, 2147483648
    %v261 = vsel %vm140, %v260, %v259
    %v262 = vsub.s32 4, %v238
    %v263 = vsel %vm140, %v262, %v238
    %v264 = vsel %vm139, %v137, %v261
    %v265 = vsel %vm139, 0, %v263
    %v266 = vmul.f32 %v264, %v264
    %v267 = vmul.f32 %v266, -0.001358992
    %v268 = vadd.f32 %v267, 0.041655596
    %v269 = vmul.f32 %v266, %v268
    %v270 = vadd.f32 %v269, -0.4999988
    %v271 = vmul.f32 %v266, %v270
    %v272 = vadd.f32 1.0, %v271
    %v273 = vmul.f32 %v264, %v264
    %v274 = vmul.f32 %v273, -0.00019511016
    %v275 = vadd.f32 %v274, 0.008332121
    %v276 = vmul.f32 %v273, %v275
    %v277 = vadd.f32 %v276, -0.16666654
    %v278 = vmul.f32 %v273, %v277
    %v279 = vadd.f32 %v278, 1.0
    %v280 = vmul.f32 %v279, %v264
    %vm281 = vweird.f32 %v137
    %v282 = vand.u32 %v265, 3
    %vm283 = vcmp.lt.s32.totalorder %v282, 2
    %vm284 = vcmp.eq.s32.totalorder %v282, 0
    %v285 = vxor.u32 %v280, 2147483648
    %v286 = vsel %vm284, %v272, %v285
    %vm287 = vcmp.eq.s32.totalorder %v282, 2
    %v288 = vxor.u32 %v272, 2147483648
    %v289 = vsel %vm287, %v288, %v280
    %v290 = vsel %vm283, %v286, %v289
    %v291 = vsel %vm281, nan, %v290
    %v292 = vpack.c.bf16 %v291, %v291
    %v293 = vand.u32 2147483647, %v137
    %vm294 = vcmp.le.f32.partialorder %v293, 0.7853982
    %vm295 = vcmp.lt.s32.totalorder %v137, 0
    %v296 = vand.u32 %v137, 2139095040
    %v297 = vshrl.u32 %v296, 23
    %v298 = vsub.s32 %v297, 127
    %v299 = vand.u32 2147483647, %v137
    %v300 = vand.u32 %v299, 8388607
    %v301 = vor.u32 %v300, 8388608
    %v302 = vsub.s32 0, %v301
    %v303 = vadd.s32 %v298, 1
    %vm304 = vcmp.gt.s32.totalorder %v303, 0
    %v305 = vsel %vm304, %v303, 0
    %v306 = vshrl.u32 %v305, 5
    %v307 = vand.u32 %v305, 31
    %v308 = vsub.s32 32, %v307
    %v309 = vshrl.u32 683565275, %v308
    %v310 = vshll.u32 683565275, %v307
    %v311 = vshrl.u32 2475754826, %v308
    %v312 = vor.u32 %v310, %v311
    %v313 = vshll.u32 2475754826, %v307
    %v314 = vshrl.u32 2131351028, %v308
    %v315 = vor.u32 %v313, %v314
    %v316 = vshll.u32 2131351028, %v307
    %v317 = vshrl.u32 2102212464, %v308
    %v318 = vor.u32 %v316, %v317
    %v319 = vshll.u32 2102212464, %v307
    %v320 = vshrl.u32 920167782, %v308
    %v321 = vor.u32 %v319, %v320
    %v322 = vshll.u32 920167782, %v307
    %v323 = vshrl.u32 1326507024, %v308
    %v324 = vor.u32 %v322, %v323
    %vm325 = vcmp.lt.s32.totalorder %v306, 1
    %vm326 = vcmp.lt.s32.totalorder %v306, 2
    %vm327 = vcmp.lt.s32.totalorder %v306, 3
    %vm328 = vcmp.lt.s32.totalorder %v306, 4
    %v329 = vsel %vm325, %v309, %v312
    %v330 = vsel %vm328, %v318, 2102212464
    %v331 = vsel %vm327, %v315, %v330
    %v332 = vsel %vm326, %v329, %v331
    %v333 = vsel %vm325, %v312, %v315
    %v334 = vsel %vm328, %v321, 920167782
    %v335 = vsel %vm327, %v318, %v334
    %v336 = vsel %vm326, %v333, %v335
    %v337 = vsel %vm325, %v315, %v318
    %v338 = vsel %vm328, %v324, 1326507024
    %v339 = vsel %vm327, %v321, %v338
    %v340 = vsel %vm326, %v337, %v339
    %v341 = vshll.u32 %v301, 8
    %v342 = vand.u32 %v341, 65535
    %v343 = vshrl.u32 %v341, 16
    %v344 = vand.u32 %v340, 65535
    %v345 = vshrl.u32 %v340, 16
    %v346 = vmul.u32 %v342, %v344
    %v347 = vmul.u32 %v342, %v345
    %v348 = vmul.u32 %v343, %v344
    %v349 = vmul.u32 %v343, %v345
    %v350 = vshll.u32 %v347, 16
    %v351 = vshrl.u32 %v347, 16
    %v352 = vshll.u32 %v348, 16
    %v353 = vshrl.u32 %v348, 16
    %vm354 = vc.u32 %v346, %v350
    %v355 = vsel %vm354, 1, 0
    %v356 = vadd.s32 %v346, %v350
    %v357 = vadd.s32 %v349, %v355
    %vm358 = vc.u32 %v356, %v352
    %v359 = vsel %vm358, 1, 0
    %v360 = vadd.s32 %v356, %v352
    %v361 = vadd.s32 %v357, %v359
    %v362 = vadd.s32 %v361, %v351
    %v363 = vadd.s32 %v362, %v353
    %v364 = vand.u32 %v341, 65535
    %v365 = vshrl.u32 %v341, 16
    %v366 = vand.u32 %v336, 65535
    %v367 = vshrl.u32 %v336, 16
    %v368 = vmul.u32 %v364, %v366
    %v369 = vmul.u32 %v364, %v367
    %v370 = vmul.u32 %v365, %v366
    %v371 = vmul.u32 %v365, %v367
    %v372 = vshll.u32 %v369, 16
    %v373 = vshrl.u32 %v369, 16
    %v374 = vshll.u32 %v370, 16
    %v375 = vshrl.u32 %v370, 16
    %vm376 = vc.u32 %v368, %v372
    %v377 = vsel %vm376, 1, 0
    %v378 = vadd.s32 %v368, %v372
    %v379 = vadd.s32 %v371, %v377
    %vm380 = vc.u32 %v378, %v374
    %v381 = vsel %vm380, 1, 0
    %v382 = vadd.s32 %v378, %v374
    %v383 = vadd.s32 %v379, %v381
    %v384 = vadd.s32 %v383, %v373
    %v385 = vadd.s32 %v384, %v375
    %v386 = vmul.u32 %v341, %v332
    %v387 = vadd.s32 %v363, %v382
    %vm388 = vc.u32 %v363, %v382
    %v389 = vadd.s32 %v385, 1
    %v390 = vsel %vm388, %v389, %v385
    %v391 = vadd.s32 %v386, %v390
    %v392 = vadd.s32 %v391, 536870912
    %v393 = vshrl.u32 %v392, 30
    %v394 = vshll.u32 %v393, 30
    %v395 = vsub.s32 %v391, %v394
    %vm396 = vcmp.lt.s32.totalorder %v395, 0
    %v397 = vsub.s32 0, %v395
    %v398 = vsel %vm396, %v397, %v395
    %v399 = vclz %v398
    %v400 = vsub.s32 %v399, 2
    %vm401 = vcmp.gt.s32.totalorder 0, %v400
    %v402 = vsel %vm401, 0, %v400
    %v403 = vsub.s32 32, %v402
    %v404 = vshll.u32 %v395, %v402
    %v405 = vshrl.u32 %v387, %v403
    %v406 = vor.u32 %v404, %v405
    %v407 = vsub.s32 4294967266, %v402
    %v408 = vadd.s32 %v407, 127
    %v409 = vshll.u32 %v408, 23
    %v410 = vor.u32 4788187, %v409
    %v411 = vand.u32 2147483647, %v410
    %v413 = vcvt.s32.f32 %v406
    %v414 = vmul.f32 %v413, %v411
    %v415 = vxor.u32 %v414, 2147483648
    %v416 = vsel %vm295, %v415, %v414
    %v417 = vsub.s32 4, %v393
    %v418 = vsel %vm295, %v417, %v393
    %v419 = vsel %vm294, %v137, %v416
    %v420 = vsel %vm294, 0, %v418
    %v421 = vmul.f32 %v419, %v419
    %v422 = vmul.f32 %v421, -0.001358992
    %v423 = vadd.f32 %v422, 0.041655596
    %v424 = vmul.f32 %v421, %v423
    %v425 = vadd.f32 %v424, -0.4999988
    %v426 = vmul.f32 %v421, %v425
    %v427 = vadd.f32 1.0, %v426
    %v428 = vmul.f32 %v419, %v419
    %v429 = vmul.f32 %v428, -0.00019511016
    %v430 = vadd.f32 %v429, 0.008332121
    %v431 = vmul.f32 %v428, %v430
    %v432 = vadd.f32 %v431, -0.16666654
    %v433 = vmul.f32 %v428, %v432
    %v434 = vadd.f32 %v433, 1.0
    %v435 = vmul.f32 %v434, %v419
    %vm436 = vweird.f32 %v137
    %v437 = vadd.s32 %v420, 3
    %v438 = vand.u32 %v437, 3
    %vm439 = vcmp.lt.s32.totalorder %v438, 2
    %vm440 = vcmp.eq.s32.totalorder %v438, 0
    %v441 = vxor.u32 %v435, 2147483648
    %v442 = vsel %vm440, %v427, %v441
    %vm443 = vcmp.eq.s32.totalorder %v438, 2
    %v444 = vxor.u32 %v427, 2147483648
    %v445 = vsel %vm443, %v444, %v435
    %v446 = vsel %vm439, %v442, %v445
    %v447 = vsel %vm436, nan, %v446
    %v448 = vpack.c.bf16 %v447, %v447
    %v449 = vld [vmem:[#allocation7] sm:$0xf]
    %v450 = vld [vmem:[#allocation7 + $0x4] sm:$0xf]
    %v451 = vld [vmem:[#allocation7 + $0x8] sm:$0xf]
    %v452 = vld [vmem:[#allocation7 + $0xc] sm:$0xf]
    %v453 = vld [vmem:[#allocation7 + $0x10] sm:$0xf]
    %v454 = vld [vmem:[#allocation7 + $0x14] sm:$0xf]
    %v455 = vld [vmem:[#allocation7 + $0x18] sm:$0xf]
    %v456 = vld [vmem:[#allocation7 + $0x1c] sm:$0xf]
    %v457 = vld [vmem:[#allocation7 + $0x20] sm:$0xf]
    %v458 = vld [vmem:[#allocation7 + $0x24] sm:$0xf]
    %v459 = vld [vmem:[#allocation7 + $0x28] sm:$0xf]
    %v460 = vld [vmem:[#allocation7 + $0x2c] sm:$0xf]
    %v461 = vld [vmem:[#allocation7 + $0x30] sm:$0xf]
    %v462 = vld [vmem:[#allocation7 + $0x34] sm:$0xf]
    %v463 = vld [vmem:[#allocation7 + $0x38] sm:$0xf]
    %v464 = vld [vmem:[#allocation7 + $0x3c] sm:$0xf]
    %v465 = vld [vmem:[#allocation9] sm:$0xf]
    %v466 = vld [vmem:[#allocation9 + $0x4] sm:$0xf]
    %v467 = vld [vmem:[#allocation9 + $0x8] sm:$0xf]
    %v468 = vld [vmem:[#allocation9 + $0xc] sm:$0xf]
    %v469 = vld [vmem:[#allocation9 + $0x10] sm:$0xf]
    %v470 = vld [vmem:[#allocation9 + $0x14] sm:$0xf]
    %v471 = vld [vmem:[#allocation9 + $0x18] sm:$0xf]
    %v472 = vld [vmem:[#allocation9 + $0x1c] sm:$0xf]
    %v473 = vld [vmem:[#allocation9 + $0x20] sm:$0xf]
    %v474 = vld [vmem:[#allocation9 + $0x24] sm:$0xf]
    %v475 = vld [vmem:[#allocation9 + $0x28] sm:$0xf]
    %v476 = vld [vmem:[#allocation9 + $0x2c] sm:$0xf]
    %v477 = vld [vmem:[#allocation9 + $0x30] sm:$0xf]
    %v478 = vld [vmem:[#allocation9 + $0x34] sm:$0xf]
    %v479 = vld [vmem:[#allocation9 + $0x38] sm:$0xf]
    %v480 = vld [vmem:[#allocation9 + $0x3c] sm:$0xf]
    %v497 = vunpack.c.l.b16 %v465
    %v498 = vunpack.c.l.b16 %v466
    %v499 = vunpack.c.l.b16 %v467
    %v500 = vunpack.c.l.b16 %v468
    %v501 = vunpack.c.l.b16 %v469
    %v502 = vunpack.c.l.b16 %v470
    %v503 = vunpack.c.l.b16 %v471
    %v504 = vunpack.c.l.b16 %v472
    %v505 = vunpack.c.l.b16 %v473
    %v506 = vunpack.c.l.b16 %v474
    %v507 = vunpack.c.l.b16 %v475
    %v508 = vunpack.c.l.b16 %v476
    %v509 = vunpack.c.l.b16 %v477
    %v510 = vunpack.c.l.b16 %v478
    %v511 = vunpack.c.l.b16 %v479
    %v512 = vunpack.c.l.b16 %v480
    %v513 = vpack.c.b16 %v498, %v497
    %v514 = vpack.c.b16 %v500, %v499
    %v515 = vpack.c.b16 %v502, %v501
    %v516 = vpack.c.b16 %v504, %v503
    %v517 = vpack.c.b16 %v506, %v505
    %v518 = vpack.c.b16 %v508, %v507
    %v519 = vpack.c.b16 %v510, %v509
    %v520 = vpack.c.b16 %v512, %v511
    %529 = vmatpush.bf16.msra.mxu0 %v520
    %530 = vmatpush.bf16.msra.mxu0 %v519
    %531 = vmatpush.bf16.msra.mxu0 %v518
    %532 = vmatpush.bf16.msra.mxu0 %v517
    %533 = vmatpush.bf16.msra.mxu0 %v516
    %534 = vmatpush.bf16.msra.mxu0 %v515
    %535 = vmatpush.bf16.msra.mxu0 %v514
    %536 = vmatpush.bf16.msra.mxu0 %v513
    %537 = vmatmul.bf16.gmra.mxu0 %v448
    %v538 = vpop.f32.mrf.mxu0
    %v539 = vadd.f32 0.0, %v538
    %v540 = vpop.f32.mrf.mxu0
    %541 = vdwg.mxu0
    %v558 = vunpack.c.l.b16 %v449
    %v559 = vunpack.c.l.b16 %v450
    %v560 = vunpack.c.l.b16 %v451
    %v561 = vunpack.c.l.b16 %v452
    %v562 = vunpack.c.l.b16 %v453
    %v563 = vunpack.c.l.b16 %v454
    %v564 = vunpack.c.l.b16 %v455
    %v565 = vunpack.c.l.b16 %v456
    %v566 = vunpack.c.l.b16 %v457
    %v567 = vunpack.c.l.b16 %v458
    %v568 = vunpack.c.l.b16 %v459
    %v569 = vunpack.c.l.b16 %v460
    %v570 = vunpack.c.l.b16 %v461
    %v571 = vunpack.c.l.b16 %v462
    %v572 = vunpack.c.l.b16 %v463
    %v573 = vunpack.c.l.b16 %v464
    %v574 = vpack.c.b16 %v559, %v558
    %v575 = vpack.c.b16 %v561, %v560
    %v576 = vpack.c.b16 %v563, %v562
    %v577 = vpack.c.b16 %v565, %v564
    %v578 = vpack.c.b16 %v567, %v566
    %v579 = vpack.c.b16 %v569, %v568
    %v580 = vpack.c.b16 %v571, %v570
    %v581 = vpack.c.b16 %v573, %v572
    %590 = vmatpush.bf16.msra.mxu0 %v581
    %591 = vmatpush.bf16.msra.mxu0 %v580
    %592 = vmatpush.bf16.msra.mxu0 %v579
    %593 = vmatpush.bf16.msra.mxu0 %v578
    %594 = vmatpush.bf16.msra.mxu0 %v577
    %595 = vmatpush.bf16.msra.mxu0 %v576
    %596 = vmatpush.bf16.msra.mxu0 %v575
    %597 = vmatpush.bf16.msra.mxu0 %v574
    %598 = vmatmul.bf16.gmra.mxu0 %v292
    %v599 = vpop.f32.mrf.mxu0
    %v600 = vadd.f32 %v539, %v599
    %v601 = vpop.f32.mrf.mxu0
    %602 = vdwg.mxu0
    %v603 = vld [vmem:[#allocation10] sm:$0x1]
    %v605 = vperm.slane %v603, 0
    %v607 = vadd.f32 %v600, %v605
    %v608 = vxor.u32 %v607, 2147483648
    %v609 = vmul.f32 %v608, 1.442695
    %v610 = vpow.pop %v609
    %v611 = vadd.f32 %v610, 1.0
    %v612 = vrcp.pop %v611
    %v613 = vmul.f32 %v611, %v612
    %v614 = vsub.f32 1.0, %v613
    %v615 = vmul.f32 %v612, %v614
    %v616 = vadd.f32 %v612, %v615
    %vm617 = vweird.f32 %v611
    %vm618 = vweird.f32 %v612
    %vm619 = vmor %vm617, %vm618
    %v620 = vsel %vm619, %v612, %v616
    %v621 = vand.u32 2147483647, %v611
    %vm622 = vcmp.eq.f32.partialorder %v621, 8.507059e+37
    %v623 = vand.u32 %v611, 2147483648
    %v624 = vor.u32 1.1754944e-38, %v623
    %v625 = vsel %vm622, %v624, %v620
    %v626 = vmul.f32 1.0, %v625
    %v627 = vmul.f32 %v607, %v626
    %v628 = vpack.c.bf16 %v627, %v627
    %v629 = vld [vmem:[#allocation12] sm:$0xf]
    %v630 = vld [vmem:[#allocation12 + $0x4] sm:$0xf]
    %v631 = vld [vmem:[#allocation12 + $0x8] sm:$0xf]
    %v632 = vld [vmem:[#allocation12 + $0xc] sm:$0xf]
    %v633 = vld [vmem:[#allocation12 + $0x10] sm:$0xf]
    %v634 = vld [vmem:[#allocation12 + $0x14] sm:$0xf]
    %v635 = vld [vmem:[#allocation12 + $0x18] sm:$0xf]
    %v636 = vld [vmem:[#allocation12 + $0x1c] sm:$0xf]
    %v637 = vld [vmem:[#allocation12 + $0x20] sm:$0xf]
    %v638 = vld [vmem:[#allocation12 + $0x24] sm:$0xf]
    %v639 = vld [vmem:[#allocation12 + $0x28] sm:$0xf]
    %v640 = vld [vmem:[#allocation12 + $0x2c] sm:$0xf]
    %v641 = vld [vmem:[#allocation12 + $0x30] sm:$0xf]
    %v642 = vld [vmem:[#allocation12 + $0x34] sm:$0xf]
    %v643 = vld [vmem:[#allocation12 + $0x38] sm:$0xf]
    %v644 = vld [vmem:[#allocation12 + $0x3c] sm:$0xf]
    %v645 = vld [vmem:[#allocation13] sm:$0x1]
    %v647 = vperm.slane %v645, 0
    %v665 = vunpack.c.l.b16 %v629
    %v666 = vunpack.c.l.b16 %v630
    %v667 = vunpack.c.l.b16 %v631
    %v668 = vunpack.c.l.b16 %v632
    %v669 = vunpack.c.l.b16 %v633
    %v670 = vunpack.c.l.b16 %v634
    %v671 = vunpack.c.l.b16 %v635
    %v672 = vunpack.c.l.b16 %v636
    %v673 = vunpack.c.l.b16 %v637
    %v674 = vunpack.c.l.b16 %v638
    %v675 = vunpack.c.l.b16 %v639
    %v676 = vunpack.c.l.b16 %v640
    %v677 = vunpack.c.l.b16 %v641
    %v678 = vunpack.c.l.b16 %v642
    %v679 = vunpack.c.l.b16 %v643
    %v680 = vunpack.c.l.b16 %v644
    %v681 = vpack.c.b16 %v666, %v665
    %v682 = vpack.c.b16 %v668, %v667
    %v683 = vpack.c.b16 %v670, %v669
    %v684 = vpack.c.b16 %v672, %v671
    %v685 = vpack.c.b16 %v674, %v673
    %v686 = vpack.c.b16 %v676, %v675
    %v687 = vpack.c.b16 %v678, %v677
    %v688 = vpack.c.b16 %v680, %v679
    %697 = vmatpush.bf16.msra.mxu0 %v688
    %698 = vmatpush.bf16.msra.mxu0 %v687
    %699 = vmatpush.bf16.msra.mxu0 %v686
    %700 = vmatpush.bf16.msra.mxu0 %v685
    %701 = vmatpush.bf16.msra.mxu0 %v684
    %702 = vmatpush.bf16.msra.mxu0 %v683
    %703 = vmatpush.bf16.msra.mxu0 %v682
    %704 = vmatpush.bf16.msra.mxu0 %v681
    %705 = vmatmul.bf16.gmra.mxu0 %v628
    %v706 = vpop.f32.mrf.mxu0
    %v707 = vadd.f32 %v647, %v706
    %v708 = vpop.f32.mrf.mxu0
    %709 = vdwg.mxu0
    %710 = vst [vmem:[#allocation15] sm:$0xff] %v707
    %s711 = smul.u32 0, 8
    %s712 = sld [smem:[#allocation3 + %s711]]
    %v713 = vld [vmem:[#allocation15] sm:$0x1]
    %s714 = scalar_lea.vmem %s8, %s712
    %v715 = vld [vmem:[%s714] sm:$0x1]
    %v716 = vadd.f32 %v713, %v715
    %717 = vst [vmem:[#allocation15] sm:$0x1] %v716
    %s718 = sadd.s32 %s711, 1
    %s719 = sld [smem:[#allocation3 + %s718]]
    %v720 = vld [vmem:[#allocation15 + $0x1] sm:$0x1]
    %s721 = scalar_lea.vmem %s8, %s719
    %v722 = vld [vmem:[%s721] sm:$0x1]
    %v723 = vadd.f32 %v720, %v722
    %724 = vst [vmem:[#allocation15 + $0x1] sm:$0x1] %v723
    %s725 = sadd.s32 %s711, 2
    %s726 = sld [smem:[#allocation3 + %s725]]
    %v727 = vld [vmem:[#allocation15 + $0x2] sm:$0x1]
    %s728 = scalar_lea.vmem %s8, %s726
    %v729 = vld [vmem:[%s728] sm:$0x1]
    %v730 = vadd.f32 %v727, %v729
    %731 = vst [vmem:[#allocation15 + $0x2] sm:$0x1] %v730
    %s732 = sadd.s32 %s711, 3
    %s733 = sld [smem:[#allocation3 + %s732]]
    %v734 = vld [vmem:[#allocation15 + $0x3] sm:$0x1]
    %s735 = scalar_lea.vmem %s8, %s733
    %v736 = vld [vmem:[%s735] sm:$0x1]
    %v737 = vadd.f32 %v734, %v736
    %738 = vst [vmem:[#allocation15 + $0x3] sm:$0x1] %v737
    %s739 = sadd.s32 %s711, 4
    %s740 = sld [smem:[#allocation3 + %s739]]
    %v741 = vld [vmem:[#allocation15 + $0x4] sm:$0x1]
    %s742 = scalar_lea.vmem %s8, %s740
    %v743 = vld [vmem:[%s742] sm:$0x1]
    %v744 = vadd.f32 %v741, %v743
    %745 = vst [vmem:[#allocation15 + $0x4] sm:$0x1] %v744
    %s746 = sadd.s32 %s711, 5
    %s747 = sld [smem:[#allocation3 + %s746]]
    %v748 = vld [vmem:[#allocation15 + $0x5] sm:$0x1]
    %s749 = scalar_lea.vmem %s8, %s747
    %v750 = vld [vmem:[%s749] sm:$0x1]
    %v751 = vadd.f32 %v748, %v750
    %752 = vst [vmem:[#allocation15 + $0x5] sm:$0x1] %v751
    %s753 = sadd.s32 %s711, 6
    %s754 = sld [smem:[#allocation3 + %s753]]
    %v755 = vld [vmem:[#allocation15 + $0x6] sm:$0x1]
    %s756 = scalar_lea.vmem %s8, %s754
    %v757 = vld [vmem:[%s756] sm:$0x1]
    %v758 = vadd.f32 %v755, %v757
    %759 = vst [vmem:[#allocation15 + $0x6] sm:$0x1] %v758
    %s760 = sadd.s32 %s711, 7
    %s761 = sld [smem:[#allocation3 + %s760]]
    %v762 = vld [vmem:[#allocation15 + $0x7] sm:$0x1]
    %s763 = scalar_lea.vmem %s8, %s761
    %v764 = vld [vmem:[%s763] sm:$0x1]
    %v765 = vadd.f32 %v762, %v764
    %766 = vst [vmem:[#allocation15 + $0x7] sm:$0x1] %v765
    // Predicated region
    $region58: #{tpu_custom_call.1} parent=1 // pred_check
      _
    $region59: #{tpu_custom_call.1} parent=1 // pred_check_branch
      %768 = sbr.rel (0) target = $region61
    $region60: #{tpu_custom_call.1} parent=1 // pred_region
      %770 = vsyncadd [#allocation6], 0
      %s772 = sshll.u32 [#allocation15], 4
      %s773 = int_to_ptr.vmem [resolvable:$true] %s772
      %s774 = sshll.u32 %s9, 4
      %s775 = int_to_ptr.hbm [resolvable:$true] %s774
      %777 = dma.vmem_to_hbm [thread:$0]  %s773, 128, %s775, [#allocation6]
    $region61: #{tpu_custom_call.1} parent=1 // pred_fallthru
      _
    // Predicated region
    $region62: #{tpu_custom_call.1} parent=1 // pred_check
      _
    $region63: #{tpu_custom_call.1} parent=1 // pred_check_branch
      %779 = sbr.rel (0) target = $region65
    $region64: #{tpu_custom_call.1} parent=1 // pred_region
      %781 = dma.done [#allocation6], 128
    $region65: #{tpu_custom_call.1} parent=1 // pred_fallthru
      _
    %782 = vsyncpa [#allocation5], 1
    %783 = vsyncpa [#allocation8], 1
    %784 = vsyncpa [#allocation11], 1
    %785 = vsyncpa [#allocation14], 1
    %786 = vsyncpa [#allocation6], 1

</llo_original>
